<compile_context>
chip_gen: v7x
topology: tpu7x:2x2x1
jax: 0.10.0
libtpu: 0.0.40
codegen_flags: <defaults>
</compile_context>

<pallas_src>
import functools

import jax
import jax.numpy as jnp
import numpy as np
from jax import lax
from jax.experimental import pallas as pl
from jax.experimental.pallas import tpu as pltpu

BN_EPS = 1e-3


# ----------------------------------------------------------------------------
# Pallas kernel: full EEGNet forward for one block of Bb samples.
# ----------------------------------------------------------------------------
def eegnet_kernel(xcol_ref, wg_ref, bsh_ref, wcomb_ref, sh3_ref, wfct_ref,
                  bfc_ref, out_ref, a_scr, z3_scr):
    Bb, NPAD = out_ref.shape
    BbT, F1P = a_scr.shape
    BbT1, F2P = z3_scr.shape
    T1 = BbT1 // Bb
    K2 = wcomb_ref.shape[0] // F1P
    T2 = wfct_ref.shape[0] // F2P
    left2 = (K2 - 1) // 2

    def elu(v):
        return jnp.where(v > 0, v, jnp.exp(jnp.minimum(v, 0.0)) - 1.0)

    # --- Stage 1: conv1 (+BN1_1) + depthwise spatial conv (+BN1_2) ----------
    # One bf16 GEMM with K = C*K1 and M = Bb*T rows; bias + ELU in f32.
    z = jnp.dot(xcol_ref[...], wg_ref[...], preferred_element_type=jnp.float32)
    a_scr[...] = elu(z + bsh_ref[...])

    # --- AvgPool2d (1,4): linear cost, 4 sublane-strided scratch reads ------
    p1 = (a_scr[pl.ds(0, BbT1, stride=4), :]
          + a_scr[pl.ds(1, BbT1, stride=4), :]
          + a_scr[pl.ds(2, BbT1, stride=4), :]
          + a_scr[pl.ds(3, BbT1, stride=4), :]) * 0.25

    # --- depthwise temporal conv ('same', K2) fused into pointwise conv -----
    # Lane-concat the K2 masked rolls of p1 (rolls on XLU, masks are cheap),
    # then a single GEMM with K = K2*F1P against the combined weight.
    t_idx = lax.broadcasted_iota(jnp.int32, (BbT1, 1), 0) % T1
    taps = []
    for k in range(K2):
        s = left2 - k
        if s == 0:
            taps.append(p1)
        else:
            src = pltpu.roll(p1, shift=s % BbT1, axis=0)
            valid = jnp.logical_and(t_idx >= s, t_idx < T1 + s)
            taps.append(jnp.where(valid, src, 0.0))
    big = jnp.concatenate(taps, axis=1).astype(jnp.bfloat16)
    z3 = jnp.dot(big, wcomb_ref[...], preferred_element_type=jnp.float32)
    z3_scr[...] = elu(z3 + sh3_ref[...])

    # --- AvgPool2d (1,8) + FC ------------------------------------------------
    # Strided reads give each pooled time slice with M = Bb rows; lane-concat
    # them so the FC is a single GEMM (K = T2*F2P) with a lane-dense output.
    slices = []
    for t2 in range(T2):
        acc = z3_scr[pl.ds(8 * t2, Bb, stride=T1), :]
        for j in range(1, 8):
            acc = acc + z3_scr[pl.ds(8 * t2 + j, Bb, stride=T1), :]
        slices.append(acc * 0.125)
    pfc = jnp.concatenate(slices, axis=1).astype(jnp.bfloat16)
    out_ref[...] = (jnp.dot(pfc, wfct_ref[...],
                            preferred_element_type=jnp.float32) + bfc_ref[...])


# ----------------------------------------------------------------------------
# Parameter construction (deterministic, synthetic).
# ----------------------------------------------------------------------------
def init_params(key, num_channels, T, num_classes):
    F1, D = 96, 1
    F2 = F1 * D
    K1 = T
    K2 = T // 16
    fc_in = F2 * (T // 32)
    ks = jax.random.split(key, 18)
    n = lambda k, shape, s=0.1: s * jax.random.normal(k, shape, jnp.float32)
    u = lambda k, shape: jax.random.uniform(k, shape, jnp.float32, 0.5, 1.5)
    return dict(
        w1=n(ks[0], (F1, 1, 1, K1)),                        # conv1
        bn1_g=u(ks[1], (F1,)), bn1_b=n(ks[2], (F1,)),
        bn1_m=n(ks[3], (F1,)), bn1_v=u(ks[4], (F1,)),
        w2=n(ks[5], (F1, 1, num_channels, 1), 0.5),         # depthwise spatial
        bn2_g=u(ks[6], (F1,)), bn2_b=n(ks[7], (F1,)),
        bn2_m=n(ks[8], (F1,)), bn2_v=u(ks[9], (F1,)),
        w3=n(ks[10], (F1, 1, 1, K2), 0.3),                  # depthwiseConv2
        w4=n(ks[11], (F2, F1, 1, 1)),                       # pointwiseConv2
        bn3_g=u(ks[12], (F2,)), bn3_b=n(ks[13], (F2,)),
        bn3_m=n(ks[14], (F2,)), bn3_v=u(ks[15], (F2,)),
        wfc=n(ks[16], (num_classes, fc_in)),
        bfc=n(ks[17], (num_classes,)),
    )


def renorm_maxnorm1(w):
    # torch.renorm(w, p=2, dim=0, maxnorm=1) applied in Conv2dWithConstraint
    norms = jnp.sqrt(jnp.sum(w * w, axis=(1, 2, 3), keepdims=True))
    return w * jnp.where(norms > 1.0, 1.0 / norms, 1.0)


def build_kernel_params(p, num_channels, T, num_classes):
    F1 = p['w1'].shape[0]
    F2 = p['w4'].shape[0]
    K1 = T
    K2 = p['w3'].shape[3]
    T1 = T // 4
    T2 = T1 // 8
    F1P, F2P = 128, 128                                  # lane-dense padding
    NPAD = ((num_classes + 127) // 128) * 128            # FC output lanes

    def fold_bn(g, b, m, v):
        sc = g / jnp.sqrt(v + BN_EPS)
        return sc, b - m * sc

    sc1, sh1 = fold_bn(p['bn1_g'], p['bn1_b'], p['bn1_m'], p['bn1_v'])
    sc2, sh2 = fold_bn(p['bn2_g'], p['bn2_b'], p['bn2_m'], p['bn2_v'])
    sc3, sh3 = fold_bn(p['bn3_g'], p['bn3_b'], p['bn3_m'], p['bn3_v'])

    w1 = p['w1'][:, 0, 0, :]                             # (F1, K1)
    w2r = renorm_maxnorm1(p['w2'])[:, 0, :, 0]           # (F1, C)

    # Fold depthwise spatial conv + both BN scales into the conv1 GEMM weights
    #   wg[c*K1 + k, f] = w1[f, k] * w2[f, c] * sc1[f] * sc2[f]
    wg96 = (w2r[:, :, None] * w1[:, None, :] * (sc1 * sc2)[:, None, None])
    wg96 = wg96.reshape(F1, num_channels * K1).T         # (C*K1, F1), f32
    wg = jnp.zeros((num_channels * K1, F1P), jnp.float32).at[:, :F1].set(wg96)
    # BN1_1 bias through the depthwise channel sum, plus BN1_2 bias:
    bsh = jnp.zeros((1, F1P), jnp.float32).at[0, :F1].set(
        sc2 * sh1 * jnp.sum(w2r, axis=1) + sh2)

    # Fused temporal-depthwise x pointwise x BN3-scale weight (f32 fold,
    # single bf16 cast at the end):
    w3 = p['w3'][:, 0, 0, :].T                           # (K2, F1)
    w4f = p['w4'][:, :, 0, 0].T * sc3[None, :]           # (F1, F2)
    wcomb_core = w3[:, :, None] * w4f[None, :, :]        # (K2, F1, F2)
    wcomb = (jnp.zeros((K2, F1P, F2P), jnp.float32)
             .at[:, :F1, :F2].set(wcomb_core).reshape(K2 * F1P, F2P))
    sh3p = jnp.zeros((1, F2P), jnp.float32).at[0, :F2].set(sh3)

    # FC weights: PyTorch flatten order is f*T2 + t2; rows are (t2*F2P + g) to
    # match the lane-concat of pooled time slices, columns padded to NPAD.
    wfc3 = p['wfc'].reshape(num_classes, F2, T2)         # [n, f, t2]
    wfct = (jnp.zeros((T2, F2P, NPAD), jnp.float32)
            .at[:, :F2, :num_classes].set(wfc3.transpose(2, 1, 0))
            .reshape(T2 * F2P, NPAD))
    bfc_pad = jnp.zeros((1, NPAD), jnp.float32).at[0, :num_classes].set(p['bfc'])

    return dict(wg=wg.astype(jnp.bfloat16), bsh=bsh,
                wcomb=wcomb.astype(jnp.bfloat16), sh3=sh3p,
                wfct=wfct.astype(jnp.bfloat16), bfc_pad=bfc_pad)


# ----------------------------------------------------------------------------
# Wrapper: glue (padding / im2col / specs) + pallas_call.
# ----------------------------------------------------------------------------
def eegnet_forward_pallas(x, kp, num_classes, block_b=32):
    # x: (B, 1, num_channels, T) float32  (PyTorch NCHW)
    B, _, C, T = x.shape
    K1 = T
    F1P = kp['wg'].shape[1]
    F2P = kp['sh3'].shape[1]
    NPAD = kp['bfc_pad'].shape[1]
    T1 = T // 4

    # Batch blocking: multiple-of-8 blocks with >=2 grid steps at realistic
    # batch sizes (keeps both v7x TensorCores busy); tiny batches use 1 step.
    if B >= 2 * block_b:
        Bb = block_b
    elif B > 8:
        Bb = max(8, ((B // 2) // 8) * 8)
    else:
        Bb = B
    Bp = ((B + Bb - 1) // Bb) * Bb
    if Bp != B:
        x = jnp.pad(x, ((0, Bp - B), (0, 0), (0, 0), (0, 0)))

    # 'same' padding for conv1 (PyTorch pads less on the left for even K1),
    # then im2col in bf16: row (b*T + t), column (c*K1 + k) = x_pad[b, c, t+k].
    padL = (K1 - 1) // 2
    padR = (K1 - 1) - padL
    x_pad = jnp.pad(x[:, 0, :, :], ((0, 0), (0, 0), (padL, padR)))
    idx = np.arange(T)[:, None] + np.arange(K1)[None, :]       # host constant
    x_col = (x_pad[:, :, idx].transpose(0, 2, 1, 3)
             .reshape(Bp * T, C * K1).astype(jnp.bfloat16))

    weights = [kp['wg'], kp['bsh'], kp['wcomb'], kp['sh3'], kp['wfct'],
               kp['bfc_pad']]
    in_specs = [pl.BlockSpec((Bb * T, C * K1), lambda i: (i, 0))]
    for w in weights:
        in_specs.append(pl.BlockSpec(w.shape, lambda i, nd=w.ndim: (0,) * nd))

    # VMEM budget: double-buffered x_col/out blocks + weights + f32 scratch.
    bytes_blocks = Bb * T * C * K1 * 2 + Bb * NPAD * 4
    bytes_weights = sum(int(w.nbytes) for w in weights)
    bytes_scratch = (Bb * T * F1P + Bb * T1 * F2P) * 4
    vmem_needed = 2 * (bytes_blocks + bytes_weights) + bytes_scratch
    vmem_limit = int(min(96 * 2**20, max(32 * 2**20, 2 * vmem_needed)))

    out = pl.pallas_call(
        eegnet_kernel,
        out_shape=jax.ShapeDtypeStruct((Bp, NPAD), jnp.float32),
        grid_spec=pltpu.PrefetchScalarGridSpec(
            num_scalar_prefetch=0,
            grid=(Bp // Bb,),
            in_specs=in_specs,
            out_specs=pl.BlockSpec((Bb, NPAD), lambda i: (i, 0)),
            scratch_shapes=[pltpu.VMEM((Bb * T, F1P), jnp.float32),
                            pltpu.VMEM((Bb * T1, F2P), jnp.float32)]),
        compiler_params=pltpu.CompilerParams(
            dimension_semantics=("parallel",),      # batch blocks independent
            vmem_limit_bytes=vmem_limit),
    )(x_col, *weights)
    return out[:B, :num_classes]


# ----------------------------------------------------------------------------
# Pure-JAX reference (eval-mode BN, identity dropout) for validation.
# ----------------------------------------------------------------------------
def eegnet_forward_reference(x, p):
    dn = ('NCHW', 'OIHW', 'NCHW')
    B = x.shape[0]
    T = x.shape[3]
    F1 = p['w1'].shape[0]
    F2 = p['w4'].shape[0]
    K1 = p['w1'].shape[3]
    K2 = p['w3'].shape[3]

    def bn(y, g, b, m, v):
        s = (1, -1, 1, 1)
        return ((y - m.reshape(s)) / jnp.sqrt(v.reshape(s) + BN_EPS)
                * g.reshape(s) + b.reshape(s))

    padL1 = (K1 - 1) // 2
    y = lax.conv_general_dilated(x, p['w1'], (1, 1),
                                 [(0, 0), (padL1, K1 - 1 - padL1)],
                                 dimension_numbers=dn)
    y = bn(y, p['bn1_g'], p['bn1_b'], p['bn1_m'], p['bn1_v'])
    y = lax.conv_general_dilated(y, renorm_maxnorm1(p['w2']), (1, 1),
                                 [(0, 0), (0, 0)], dimension_numbers=dn,
                                 feature_group_count=F1)
    y = bn(y, p['bn2_g'], p['bn2_b'], p['bn2_m'], p['bn2_v'])
    y = jax.nn.elu(y)
    y = y.reshape(B, F1, 1, T // 4, 4).mean(-1)
    padL2 = (K2 - 1) // 2
    y = lax.conv_general_dilated(y, p['w3'], (1, 1),
                                 [(0, 0), (padL2, K2 - 1 - padL2)],
                                 dimension_numbers=dn, feature_group_count=F1)
    y = lax.conv_general_dilated(y, p['w4'], (1, 1), [(0, 0), (0, 0)],
                                 dimension_numbers=dn)
    y = bn(y, p['bn3_g'], p['bn3_b'], p['bn3_m'], p['bn3_v'])
    y = jax.nn.elu(y)
    y = y.reshape(B, F2, 1, (T // 4) // 8, 8).mean(-1)
    y = y.reshape(B, -1)
    return y @ p['wfc'].T + p['bfc']


if __name__ == "__main__":
    B, C, T, NCLS = 2, 4, 32, 4          # num_channels=4, T=32, num_classes=4
    key = jax.random.PRNGKey(0)
    pkey, xkey = jax.random.split(key)
    params = init_params(pkey, C, T, NCLS)
    x = jax.random.normal(xkey, (B, 1, C, T), jnp.float32)

    kparams = build_kernel_params(params, C, T, NCLS)
    fwd = jax.jit(functools.partial(eegnet_forward_pallas, num_classes=NCLS))
    out = jax.block_until_ready(fwd(x, kparams))

    ref = eegnet_forward_reference(x, params)
    # bf16 MXU operands (f32 accumulation) -> loosened tolerance vs pure f32.
    np.testing.assert_allclose(np.asarray(out), np.asarray(ref),
                               rtol=2e-2, atol=2e-2)
    print("KERNEL_OK")
</pallas_src>

<mosaic_0001>
module attributes {stable_mosaic.version = 11 : i64} {
  func.func @eegnet_kernel(%arg0: i32, %arg1: memref<64x128xbf16, #tpu.memory_space<vmem>>, %arg2: memref<128x128xbf16, #tpu.memory_space<vmem>>, %arg3: memref<1x128xf32, #tpu.memory_space<vmem>>, %arg4: memref<256x128xbf16, #tpu.memory_space<vmem>>, %arg5: memref<1x128xf32, #tpu.memory_space<vmem>>, %arg6: memref<128x128xbf16, #tpu.memory_space<vmem>>, %arg7: memref<1x128xf32, #tpu.memory_space<vmem>>, %arg8: memref<2x128xf32, #tpu.memory_space<vmem>>, %arg9: memref<64x128xf32, #tpu.memory_space<vmem>>, %arg10: memref<16x128xf32, #tpu.memory_space<vmem>>) attributes {dimension_semantics = [#tpu.dimension_semantics<parallel>], iteration_bounds = array<i64: 1>, scalar_prefetch = 0 : i64, scratch_operands = 2 : i64, tpu.core_type = #tpu.core_type<tc>, window_params = [{transform_indices = @transform_0, window_bounds = array<i64: 64, 128>}, {pipeline_mode = #tpu.pipeline_mode<synchronous>, transform_indices = @transform_1, window_bounds = array<i64: 128, 128>}, {pipeline_mode = #tpu.pipeline_mode<synchronous>, transform_indices = @transform_2, window_bounds = array<i64: 1, 128>}, {pipeline_mode = #tpu.pipeline_mode<synchronous>, transform_indices = @transform_3, window_bounds = array<i64: 256, 128>}, {pipeline_mode = #tpu.pipeline_mode<synchronous>, transform_indices = @transform_4, window_bounds = array<i64: 1, 128>}, {pipeline_mode = #tpu.pipeline_mode<synchronous>, transform_indices = @transform_5, window_bounds = array<i64: 128, 128>}, {pipeline_mode = #tpu.pipeline_mode<synchronous>, transform_indices = @transform_6, window_bounds = array<i64: 1, 128>}, {transform_indices = @transform_7, window_bounds = array<i64: 2, 128>}]} {
    %c0 = arith.constant 0 : index
    %c0_0 = arith.constant 0 : index
    %0 = vector.load %arg1[%c0, %c0_0] : memref<64x128xbf16, #tpu.memory_space<vmem>>, vector<64x128xbf16>
    %c0_1 = arith.constant 0 : index
    %c0_2 = arith.constant 0 : index
    %1 = vector.load %arg2[%c0_1, %c0_2] : memref<128x128xbf16, #tpu.memory_space<vmem>>, vector<128x128xbf16>
    %cst = arith.constant dense<0.000000e+00> : vector<64x128xf32>
    %2 = tpu.matmul %0, %1, %cst {dimension_numbers = #tpu.dot_dimension_numbers<[1], [0], [0], [1], [0, 0, 1, 1], [], []>} : vector<64x128xbf16>, vector<128x128xbf16>, vector<64x128xf32> -> vector<64x128xf32>
    %c0_3 = arith.constant 0 : index
    %c0_4 = arith.constant 0 : index
    %3 = vector.load %arg3[%c0_3, %c0_4] : memref<1x128xf32, #tpu.memory_space<vmem>>, vector<1x128xf32>
    %4 = vector.broadcast %3 : vector<1x128xf32> to vector<64x128xf32>
    %5 = arith.addf %2, %4 : vector<64x128xf32>
    %cst_5 = arith.constant 0.000000e+00 : f32
    %6 = vector.broadcast %cst_5 : f32 to vector<64x128xf32>
    %7 = arith.cmpf ogt, %5, %6 : vector<64x128xf32>
    %cst_6 = arith.constant 0.000000e+00 : f32
    %8 = vector.broadcast %cst_6 : f32 to vector<64x128xf32>
    %9 = arith.minimumf %5, %8 : vector<64x128xf32>
    %10 = math.exp %9 : vector<64x128xf32>
    %cst_7 = arith.constant 1.000000e+00 : f32
    %11 = vector.broadcast %cst_7 : f32 to vector<64x128xf32>
    %12 = arith.subf %10, %11 : vector<64x128xf32>
    %13 = arith.select %7, %5, %12 : vector<64x128xi1>, vector<64x128xf32>
    %c0_8 = arith.constant 0 : index
    %c0_9 = arith.constant 0 : index
    %14 = vector.load %arg9[%c0_8, %c0_9] : memref<64x128xf32, #tpu.memory_space<vmem>>, vector<64x128xf32>
    tpu.vector_store %arg9[%c0_8, %c0_9], %13 {strides = array<i32>} : memref<64x128xf32, #tpu.memory_space<vmem>>, vector<64x128xf32>,
    %c0_10 = arith.constant 0 : index
    %c0_11 = arith.constant 0 : index
    %15 = tpu.strided_load %arg9[%c0_10, %c0_11] {strides = array<i32: 4, 1>} : memref<64x128xf32, #tpu.memory_space<vmem>>, vector<16x128xf32>
    %c1 = arith.constant 1 : index
    %c0_12 = arith.constant 0 : index
    %16 = tpu.strided_load %arg9[%c1, %c0_12] {strides = array<i32: 4, 1>} : memref<64x128xf32, #tpu.memory_space<vmem>>, vector<16x128xf32>
    %17 = arith.addf %15, %16 : vector<16x128xf32>
    %c2 = arith.constant 2 : index
    %c0_13 = arith.constant 0 : index
    %18 = tpu.strided_load %arg9[%c2, %c0_13] {strides = array<i32: 4, 1>} : memref<64x128xf32, #tpu.memory_space<vmem>>, vector<16x128xf32>
    %19 = arith.addf %17, %18 : vector<16x128xf32>
    %c3 = arith.constant 3 : index
    %c0_14 = arith.constant 0 : index
    %20 = tpu.strided_load %arg9[%c3, %c0_14] {strides = array<i32: 4, 1>} : memref<64x128xf32, #tpu.memory_space<vmem>>, vector<16x128xf32>
    %21 = arith.addf %19, %20 : vector<16x128xf32>
    %cst_15 = arith.constant 2.500000e-01 : f32
    %22 = vector.broadcast %cst_15 : f32 to vector<16x128xf32>
    %23 = arith.mulf %21, %22 : vector<16x128xf32>
    %24 = tpu.iota {dimensions = array<i32: 0>} : vector<16x1xi32>
    %c8_i32 = arith.constant 8 : i32
    %c0_i32 = arith.constant 0 : i32
    %25 = arith.cmpi eq, %c8_i32, %c0_i32 : i32
    %c1_i32 = arith.constant 1 : i32
    %26 = arith.select %25, %c1_i32, %c8_i32 : i32
    %27 = vector.broadcast %26 : i32 to vector<16x1xi32>
    %28 = arith.remsi %24, %27 : vector<16x1xi32>
    %c0_i32_16 = arith.constant 0 : i32
    %29 = vector.broadcast %c0_i32_16 : i32 to vector<16x1xi32>
    %30 = arith.cmpi ne, %28, %29 : vector<16x1xi32>
    %c0_i32_17 = arith.constant 0 : i32
    %31 = vector.broadcast %c0_i32_17 : i32 to vector<16x1xi32>
    %32 = arith.cmpi slt, %28, %31 : vector<16x1xi32>
    %c0_i32_18 = arith.constant 0 : i32
    %33 = arith.cmpi slt, %26, %c0_i32_18 : i32
    %34 = vector.broadcast %33 : i1 to vector<16x1xi1>
    %35 = vector.broadcast %34 : vector<16x1xi1> to vector<16x1xi1>
    %36 = arith.xori %32, %35 : vector<16x1xi1>
    %37 = arith.andi %36, %30 : vector<16x1xi1>
    %38 = vector.broadcast %26 : i32 to vector<16x1xi32>
    %39 = arith.addi %28, %38 : vector<16x1xi32>
    %40 = arith.select %37, %39, %28 : vector<16x1xi1>, vector<16x1xi32>
    %c15_i32 = arith.constant 15 : i32
    %41 = tpu.dynamic_rotate %23 by %c15_i32 dim 0 : vector<16x128xf32>, i32 -> vector<16x128xf32>
    %c-1_i32 = arith.constant -1 : i32
    %42 = vector.broadcast %c-1_i32 : i32 to vector<16x1xi32>
    %43 = arith.cmpi sge, %40, %42 : vector<16x1xi32>
    %c7_i32 = arith.constant 7 : i32
    %44 = vector.broadcast %c7_i32 : i32 to vector<16x1xi32>
    %45 = arith.cmpi slt, %40, %44 : vector<16x1xi32>
    %46 = arith.andi %43, %45 : vector<16x1xi1>
    %cst_19 = arith.constant 0.000000e+00 : f32
    %47 = vector.shape_cast %46 : vector<16x1xi1> to vector<16x1xi1>
    %48 = vector.broadcast %47 : vector<16x1xi1> to vector<16x128xi1>
    %49 = vector.broadcast %cst_19 : f32 to vector<16x128xf32>
    %50 = arith.select %48, %41, %49 : vector<16x128xi1>, vector<16x128xf32>
    %51 = tpu.concatenate %23, %50 in 1 : vector<16x128xf32>, vector<16x128xf32> -> vector<16x256xf32>
    %52 = arith.truncf %51 : vector<16x256xf32> to vector<16x256xbf16>
    %c0_20 = arith.constant 0 : index
    %c0_21 = arith.constant 0 : index
    %53 = vector.load %arg4[%c0_20, %c0_21] : memref<256x128xbf16, #tpu.memory_space<vmem>>, vector<256x128xbf16>
    %cst_22 = arith.constant dense<0.000000e+00> : vector<16x128xf32>
    %54 = tpu.matmul %52, %53, %cst_22 {dimension_numbers = #tpu.dot_dimension_numbers<[1], [0], [0], [1], [0, 0, 1, 1], [], []>} : vector<16x256xbf16>, vector<256x128xbf16>, vector<16x128xf32> -> vector<16x128xf32>
    %c0_23 = arith.constant 0 : index
    %c0_24 = arith.constant 0 : index
    %55 = vector.load %arg5[%c0_23, %c0_24] : memref<1x128xf32, #tpu.memory_space<vmem>>, vector<1x128xf32>
    %56 = vector.broadcast %55 : vector<1x128xf32> to vector<16x128xf32>
    %57 = arith.addf %54, %56 : vector<16x128xf32>
    %cst_25 = arith.constant 0.000000e+00 : f32
    %58 = vector.broadcast %cst_25 : f32 to vector<16x128xf32>
    %59 = arith.cmpf ogt, %57, %58 : vector<16x128xf32>
    %cst_26 = arith.constant 0.000000e+00 : f32
    %60 = vector.broadcast %cst_26 : f32 to vector<16x128xf32>
    %61 = arith.minimumf %57, %60 : vector<16x128xf32>
    %62 = math.exp %61 : vector<16x128xf32>
    %cst_27 = arith.constant 1.000000e+00 : f32
    %63 = vector.broadcast %cst_27 : f32 to vector<16x128xf32>
    %64 = arith.subf %62, %63 : vector<16x128xf32>
    %65 = arith.select %59, %57, %64 : vector<16x128xi1>, vector<16x128xf32>
    %c0_28 = arith.constant 0 : index
    %c0_29 = arith.constant 0 : index
    %66 = vector.load %arg10[%c0_28, %c0_29] : memref<16x128xf32, #tpu.memory_space<vmem>>, vector<16x128xf32>
    tpu.vector_store %arg10[%c0_28, %c0_29], %65 {strides = array<i32>} : memref<16x128xf32, #tpu.memory_space<vmem>>, vector<16x128xf32>,
    %c0_30 = arith.constant 0 : index
    %c0_31 = arith.constant 0 : index
    %67 = tpu.strided_load %arg10[%c0_30, %c0_31] {strides = array<i32: 8, 1>} : memref<16x128xf32, #tpu.memory_space<vmem>>, vector<2x128xf32>
    %c1_32 = arith.constant 1 : index
    %c0_33 = arith.constant 0 : index
    %68 = tpu.strided_load %arg10[%c1_32, %c0_33] {strides = array<i32: 8, 1>} : memref<16x128xf32, #tpu.memory_space<vmem>>, vector<2x128xf32>
    %69 = arith.addf %67, %68 : vector<2x128xf32>
    %c2_34 = arith.constant 2 : index
    %c0_35 = arith.constant 0 : index
    %70 = tpu.strided_load %arg10[%c2_34, %c0_35] {strides = array<i32: 8, 1>} : memref<16x128xf32, #tpu.memory_space<vmem>>, vector<2x128xf32>
    %71 = arith.addf %69, %70 : vector<2x128xf32>
    %c3_36 = arith.constant 3 : index
    %c0_37 = arith.constant 0 : index
    %72 = tpu.strided_load %arg10[%c3_36, %c0_37] {strides = array<i32: 8, 1>} : memref<16x128xf32, #tpu.memory_space<vmem>>, vector<2x128xf32>
    %73 = arith.addf %71, %72 : vector<2x128xf32>
    %c4 = arith.constant 4 : index
    %c0_38 = arith.constant 0 : index
    %74 = tpu.strided_load %arg10[%c4, %c0_38] {strides = array<i32: 8, 1>} : memref<16x128xf32, #tpu.memory_space<vmem>>, vector<2x128xf32>
    %75 = arith.addf %73, %74 : vector<2x128xf32>
    %c5 = arith.constant 5 : index
    %c0_39 = arith.constant 0 : index
    %76 = tpu.strided_load %arg10[%c5, %c0_39] {strides = array<i32: 8, 1>} : memref<16x128xf32, #tpu.memory_space<vmem>>, vector<2x128xf32>
    %77 = arith.addf %75, %76 : vector<2x128xf32>
    %c6 = arith.constant 6 : index
    %c0_40 = arith.constant 0 : index
    %78 = tpu.strided_load %arg10[%c6, %c0_40] {strides = array<i32: 8, 1>} : memref<16x128xf32, #tpu.memory_space<vmem>>, vector<2x128xf32>
    %79 = arith.addf %77, %78 : vector<2x128xf32>
    %c7 = arith.constant 7 : index
    %c0_41 = arith.constant 0 : index
    %80 = tpu.strided_load %arg10[%c7, %c0_41] {strides = array<i32: 8, 1>} : memref<16x128xf32, #tpu.memory_space<vmem>>, vector<2x128xf32>
    %81 = arith.addf %79, %80 : vector<2x128xf32>
    %cst_42 = arith.constant 1.250000e-01 : f32
    %82 = vector.broadcast %cst_42 : f32 to vector<2x128xf32>
    %83 = arith.mulf %81, %82 : vector<2x128xf32>
    %84 = arith.truncf %83 : vector<2x128xf32> to vector<2x128xbf16>
    %c0_43 = arith.constant 0 : index
    %c0_44 = arith.constant 0 : index
    %85 = vector.load %arg6[%c0_43, %c0_44] : memref<128x128xbf16, #tpu.memory_space<vmem>>, vector<128x128xbf16>
    %cst_45 = arith.constant dense<0.000000e+00> : vector<2x128xf32>
    %86 = tpu.matmul %84, %85, %cst_45 {dimension_numbers = #tpu.dot_dimension_numbers<[1], [0], [0], [1], [0, 0, 1, 1], [], []>} : vector<2x128xbf16>, vector<128x128xbf16>, vector<2x128xf32> -> vector<2x128xf32>
    %c0_46 = arith.constant 0 : index
    %c0_47 = arith.constant 0 : index
    %87 = vector.load %arg7[%c0_46, %c0_47] : memref<1x128xf32, #tpu.memory_space<vmem>>, vector<1x128xf32>
    %88 = vector.broadcast %87 : vector<1x128xf32> to vector<2x128xf32>
    %89 = arith.addf %86, %88 : vector<2x128xf32>
    %c0_48 = arith.constant 0 : index
    %c0_49 = arith.constant 0 : index
    %90 = vector.load %arg8[%c0_48, %c0_49] : memref<2x128xf32, #tpu.memory_space<vmem>>, vector<2x128xf32>
    tpu.vector_store %arg8[%c0_48, %c0_49], %89 {strides = array<i32>} : memref<2x128xf32, #tpu.memory_space<vmem>>, vector<2x128xf32>,
    return
  }
  func.func @transform_0(%arg0: i32) -> (i32, i32) {
    %c0_i32 = arith.constant 0 : i32
    %c0_i32_0 = arith.constant 0 : i32
    return %arg0, %c0_i32 : i32, i32
  }
  func.func @transform_1(%arg0: i32) -> (i32, i32) {
    %c0_i32 = arith.constant 0 : i32
    %c0_i32_0 = arith.constant 0 : i32
    %c0_i32_1 = arith.constant 0 : i32
    return %c0_i32, %c0_i32_0 : i32, i32
  }
  func.func @transform_2(%arg0: i32) -> (i32, i32) {
    %c0_i32 = arith.constant 0 : i32
    %c0_i32_0 = arith.constant 0 : i32
    %c0_i32_1 = arith.constant 0 : i32
    return %c0_i32, %c0_i32_0 : i32, i32
  }
  func.func @transform_3(%arg0: i32) -> (i32, i32) {
    %c0_i32 = arith.constant 0 : i32
    %c0_i32_0 = arith.constant 0 : i32
    %c0_i32_1 = arith.constant 0 : i32
    return %c0_i32, %c0_i32_0 : i32, i32
  }
  func.func @transform_4(%arg0: i32) -> (i32, i32) {
    %c0_i32 = arith.constant 0 : i32
    %c0_i32_0 = arith.constant 0 : i32
    %c0_i32_1 = arith.constant 0 : i32
    return %c0_i32, %c0_i32_0 : i32, i32
  }
  func.func @transform_5(%arg0: i32) -> (i32, i32) {
    %c0_i32 = arith.constant 0 : i32
    %c0_i32_0 = arith.constant 0 : i32
    %c0_i32_1 = arith.constant 0 : i32
    return %c0_i32, %c0_i32_0 : i32, i32
  }
  func.func @transform_6(%arg0: i32) -> (i32, i32) {
    %c0_i32 = arith.constant 0 : i32
    %c0_i32_0 = arith.constant 0 : i32
    %c0_i32_1 = arith.constant 0 : i32
    return %c0_i32, %c0_i32_0 : i32, i32
  }
  func.func @transform_7(%arg0: i32) -> (i32, i32) {
    %c0_i32 = arith.constant 0 : i32
    %c0_i32_0 = arith.constant 0 : i32
    return %arg0, %c0_i32 : i32, i32
  }
}

</mosaic_0001>

<llo_original>
// kernel: eegnet_forward_pallas.1
$region0: #{eegnet_forward_pallas.1}
  #allocation0 [shape = 'u32[]', space=smem, size = 0x4, offset = 0x4, fixed_abs, tag = 'smem constant byte address 0x4 - core index']
  #allocation1 [shape = 'u32[144,128]{1,0:T(1,128)}', space=vmem, size = 0x12000, scoped, tag = 'internal scratch']
  #allocation2 [shape = 'f32[64,128]{1,0:T(8,128)}', space=vmem, size = 0x8000, scoped, tag = 'scratch operand']
  #allocation3 [shape = 'f32[16,128]{1,0:T(8,128)}', space=vmem, size = 0x2000, scoped, tag = 'scratch operand']
  %s0 = inlined_call_operand.vmem [shape: bf16[64,128], index: 0, kind: input, shape index: {}]
  %s1 = inlined_call_operand.vmem [shape: bf16[128,128], index: 1, kind: input, shape index: {}]
  %s2 = inlined_call_operand.vmem [shape: f32[1,128], index: 2, kind: input, shape index: {}]
  %s3 = inlined_call_operand.vmem [shape: bf16[256,128], index: 3, kind: input, shape index: {}]
  %s4 = inlined_call_operand.vmem [shape: f32[1,128], index: 4, kind: input, shape index: {}]
  %s5 = inlined_call_operand.vmem [shape: bf16[128,128], index: 5, kind: input, shape index: {}]
  %s6 = inlined_call_operand.vmem [shape: f32[1,128], index: 6, kind: input, shape index: {}]
  %s7 = inlined_call_operand.hbm [shape: f32[2,128], index: 7, kind: output, shape index: {}]
  %s8 = sld [smem:[#allocation0]]
  $region38: #{eegnet_forward_pallas.1} parent=0
    _
  %s10 = ssub.s32 1, %s8
  %s11 = scalar_select 0, %s10, %s8
  $region1: #{eegnet_forward_pallas.1} parent=0
    #allocation4 [shape = 'u8[1024]{0}', space=vmem, size = 0x400, scoped, tag = 'output window, operand 0, single buffered']
    #allocation5 [shape = 's32[1]{0}', space=sflag, size = 0x4, scoped, tag = 'scoped memory for eegnet_forward_pallas.1']
    %12 = vsyncpa [#allocation5], 0
    // Predicated region
    $region2: #{eegnet_forward_pallas.1} parent=1 // pred_check
      _
    $region3: #{eegnet_forward_pallas.1} parent=1 // pred_check_branch
      %14 = sbr.rel (0) target = $region5
    $region4: #{eegnet_forward_pallas.1} parent=1 // pred_region
      _
    $region5: #{eegnet_forward_pallas.1} parent=1 // pred_fallthru
      _
    // Predicated region
    $region6: #{eegnet_forward_pallas.1} parent=1 // pred_check
      _
    $region7: #{eegnet_forward_pallas.1} parent=1 // pred_check_branch
      %16 = sbr.rel (0) target = $region9
    $region8: #{eegnet_forward_pallas.1} parent=1 // pred_region
      _
    $region9: #{eegnet_forward_pallas.1} parent=1 // pred_fallthru
      _
    // Predicated region
    $region10: #{eegnet_forward_pallas.1} parent=1 // pred_check
      _
    $region11: #{eegnet_forward_pallas.1} parent=1 // pred_check_branch
      %18 = sbr.rel (0) target = $region13
    $region12: #{eegnet_forward_pallas.1} parent=1 // pred_region
      _
    $region13: #{eegnet_forward_pallas.1} parent=1 // pred_fallthru
      _
    // Predicated region
    $region14: #{eegnet_forward_pallas.1} parent=1 // pred_check
      _
    $region15: #{eegnet_forward_pallas.1} parent=1 // pred_check_branch
      %20 = sbr.rel (0) target = $region17
    $region16: #{eegnet_forward_pallas.1} parent=1 // pred_region
      _
    $region17: #{eegnet_forward_pallas.1} parent=1 // pred_fallthru
      _
    // Predicated region
    $region18: #{eegnet_forward_pallas.1} parent=1 // pred_check
      _
    $region19: #{eegnet_forward_pallas.1} parent=1 // pred_check_branch
      %22 = sbr.rel (0) target = $region21
    $region20: #{eegnet_forward_pallas.1} parent=1 // pred_region
      _
    $region21: #{eegnet_forward_pallas.1} parent=1 // pred_fallthru
      _
    // Predicated region
    $region22: #{eegnet_forward_pallas.1} parent=1 // pred_check
      _
    $region23: #{eegnet_forward_pallas.1} parent=1 // pred_check_branch
      %24 = sbr.rel (0) target = $region25
    $region24: #{eegnet_forward_pallas.1} parent=1 // pred_region
      _
    $region25: #{eegnet_forward_pallas.1} parent=1 // pred_fallthru
      _
    // Predicated region
    $region26: #{eegnet_forward_pallas.1} parent=1 // pred_check
      _
    $region27: #{eegnet_forward_pallas.1} parent=1 // pred_check_branch
      %26 = sbr.rel (0) target = $region29
    $region28: #{eegnet_forward_pallas.1} parent=1 // pred_region
      _
    $region29: #{eegnet_forward_pallas.1} parent=1 // pred_fallthru
      _
    %v28 = vld [vmem:[%s0] sm:$0xf]
    %v29 = vld [vmem:[%s0 + $0x4] sm:$0xf]
    %v30 = vld [vmem:[%s0 + $0x8] sm:$0xf]
    %v31 = vld [vmem:[%s0 + $0xc] sm:$0xf]
    %v32 = vld [vmem:[%s0 + $0x10] sm:$0xf]
    %v33 = vld [vmem:[%s0 + $0x14] sm:$0xf]
    %v34 = vld [vmem:[%s0 + $0x18] sm:$0xf]
    %v35 = vld [vmem:[%s0 + $0x1c] sm:$0xf]
    %v36 = vld [vmem:[%s1] sm:$0xf]
    %v37 = vld [vmem:[%s1 + $0x4] sm:$0xf]
    %v38 = vld [vmem:[%s1 + $0x8] sm:$0xf]
    %v39 = vld [vmem:[%s1 + $0xc] sm:$0xf]
    %v40 = vld [vmem:[%s1 + $0x10] sm:$0xf]
    %v41 = vld [vmem:[%s1 + $0x14] sm:$0xf]
    %v42 = vld [vmem:[%s1 + $0x18] sm:$0xf]
    %v43 = vld [vmem:[%s1 + $0x1c] sm:$0xf]
    %v44 = vld [vmem:[%s1 + $0x20] sm:$0xf]
    %v45 = vld [vmem:[%s1 + $0x24] sm:$0xf]
    %v46 = vld [vmem:[%s1 + $0x28] sm:$0xf]
    %v47 = vld [vmem:[%s1 + $0x2c] sm:$0xf]
    %v48 = vld [vmem:[%s1 + $0x30] sm:$0xf]
    %v49 = vld [vmem:[%s1 + $0x34] sm:$0xf]
    %v50 = vld [vmem:[%s1 + $0x38] sm:$0xf]
    %v51 = vld [vmem:[%s1 + $0x3c] sm:$0xf]
    %v52 = vld [vmem:[%s2] sm:$0x1]
    %v54 = vlaneseq
    %v55 = vshrl.u32 %v54, 7
    %v56 = vsub.s32 0, %v55
    %v57 = vrot.slane %v52, %v56
    %v67 = vunpack.c.l.b16 %v28
    %v68 = vunpack.c.l.b16 %v29
    %v69 = vunpack.c.l.b16 %v30
    %v70 = vunpack.c.l.b16 %v31
    %v71 = vunpack.c.l.b16 %v32
    %v72 = vunpack.c.l.b16 %v33
    %v73 = vunpack.c.l.b16 %v34
    %v74 = vunpack.c.l.b16 %v35
    %v75 = vpack.c.b16 %v68, %v67
    %v76 = vpack.c.b16 %v70, %v69
    %v77 = vpack.c.b16 %v72, %v71
    %v78 = vpack.c.b16 %v74, %v73
    %v99 = vunpack.c.l.b16 %v36
    %v100 = vunpack.c.l.b16 %v37
    %v101 = vunpack.c.l.b16 %v38
    %v102 = vunpack.c.l.b16 %v39
    %v103 = vunpack.c.l.b16 %v40
    %v104 = vunpack.c.l.b16 %v41
    %v105 = vunpack.c.l.b16 %v42
    %v106 = vunpack.c.l.b16 %v43
    %v107 = vunpack.c.l.b16 %v44
    %v108 = vunpack.c.l.b16 %v45
    %v109 = vunpack.c.l.b16 %v46
    %v110 = vunpack.c.l.b16 %v47
    %v111 = vunpack.c.l.b16 %v48
    %v112 = vunpack.c.l.b16 %v49
    %v113 = vunpack.c.l.b16 %v50
    %v114 = vunpack.c.l.b16 %v51
    %v115 = vpack.c.b16 %v100, %v99
    %v116 = vpack.c.b16 %v102, %v101
    %v117 = vpack.c.b16 %v104, %v103
    %v118 = vpack.c.b16 %v106, %v105
    %v119 = vpack.c.b16 %v108, %v107
    %v120 = vpack.c.b16 %v110, %v109
    %v121 = vpack.c.b16 %v112, %v111
    %v122 = vpack.c.b16 %v114, %v113
    %131 = vmatprep.subr.bf16.mxu0 0
    %132 = vmatpush1.bf16.msra.mxu0 %v115
    %133 = vmatprep.subr.bf16.mxu0 0
    %134 = vmatpush1.bf16.msra.mxu0 %v116
    %135 = vmatprep.subr.bf16.mxu0 0
    %136 = vmatpush1.bf16.msra.mxu0 %v117
    %137 = vmatprep.subr.bf16.mxu0 0
    %138 = vmatpush1.bf16.msra.mxu0 %v118
    %139 = vmatprep.subr.bf16.mxu0 0
    %140 = vmatpush1.bf16.msra.mxu0 %v119
    %141 = vmatprep.subr.bf16.mxu0 0
    %142 = vmatpush1.bf16.msra.mxu0 %v120
    %143 = vmatprep.subr.bf16.mxu0 0
    %144 = vmatpush1.bf16.msra.mxu0 %v121
    %145 = vmatprep.subr.bf16.mxu0 0
    %146 = vmatpush1.bf16.msra.mxu0 %v122
    %147 = vmatprep.subr.bf16.mxu0 0
    %148 = vmatpush1.bf16.msra.mxu0 0
    %149 = vmatprep.subr.bf16.mxu0 0
    %150 = vmatpush1.bf16.msra.mxu0 0
    %151 = vmatprep.subr.bf16.mxu0 0
    %152 = vmatpush1.bf16.msra.mxu0 0
    %153 = vmatprep.subr.bf16.mxu0 0
    %154 = vmatpush1.bf16.msra.mxu0 0
    %155 = vmatprep.subr.bf16.mxu0 0
    %156 = vmatpush1.bf16.msra.mxu0 0
    %157 = vmatprep.subr.bf16.mxu0 0
    %158 = vmatpush1.bf16.msra.mxu0 0
    %159 = vmatprep.subr.bf16.mxu0 0
    %160 = vmatpush1.bf16.msra.mxu0 0
    %161 = vmatprep.subr.bf16.mxu0 0
    %162 = vmatpush1.bf16.msra.mxu0 0
    %163 = vmatprep.mubr.bf16.mxu0 0
    %164 = vmatmul.mubr.bf16.gmra.mrb[0].mxu0 %v75
    %v165 = vpop.f32.mrb[0].mxu0
    %v166 = vadd.f32 %v57, %v165
    %v167 = vpop.f32.mrb[0].mxu0
    %v168 = vpop.f32.mrb[0].mxu0
    %v169 = vadd.f32 %v57, %v168
    %v170 = vpop.f32.mrb[0].mxu0
    %171 = vmatprep.mubr.bf16.mxu0 0
    %172 = vmatmul.mubr.bf16.gmra.mrb[0].mxu0 %v76
    %v173 = vpop.f32.mrb[0].mxu0
    %v174 = vadd.f32 %v57, %v173
    %v175 = vpop.f32.mrb[0].mxu0
    %v176 = vpop.f32.mrb[0].mxu0
    %v177 = vadd.f32 %v57, %v176
    %v178 = vpop.f32.mrb[0].mxu0
    %179 = vmatprep.mubr.bf16.mxu0 0
    %180 = vmatmul.mubr.bf16.gmra.mrb[0].mxu0 %v77
    %v181 = vpop.f32.mrb[0].mxu0
    %v182 = vadd.f32 %v57, %v181
    %v183 = vpop.f32.mrb[0].mxu0
    %v184 = vpop.f32.mrb[0].mxu0
    %v185 = vadd.f32 %v57, %v184
    %v186 = vpop.f32.mrb[0].mxu0
    %187 = vmatprep.mubr.bf16.mxu0 0
    %188 = vmatmul.mubr.bf16.gmra.mrb[0].mxu0 %v78
    %v189 = vpop.f32.mrb[0].mxu0
    %v190 = vadd.f32 %v57, %v189
    %v191 = vpop.f32.mrb[0].mxu0
    %v192 = vpop.f32.mrb[0].mxu0
    %v193 = vadd.f32 %v57, %v192
    %v194 = vpop.f32.mrb[0].mxu0
    %195 = vdwg.mxu0
    %vm196 = vcmp.gt.f32.partialorder %v166, 0.0
    %vm197 = vcmp.gt.f32.partialorder %v169, 0.0
    %vm198 = vcmp.gt.f32.partialorder %v174, 0.0
    %vm199 = vcmp.gt.f32.partialorder %v177, 0.0
    %vm200 = vcmp.gt.f32.partialorder %v182, 0.0
    %vm201 = vcmp.gt.f32.partialorder %v185, 0.0
    %vm202 = vcmp.gt.f32.partialorder %v190, 0.0
    %vm203 = vcmp.gt.f32.partialorder %v193, 0.0
    %v204 = vmin.f32 %v166, 0.0
    %v205 = vmin.f32 %v169, 0.0
    %v206 = vmin.f32 %v174, 0.0
    %v207 = vmin.f32 %v177, 0.0
    %v208 = vmin.f32 %v182, 0.0
    %v209 = vmin.f32 %v185, 0.0
    %v210 = vmin.f32 %v190, 0.0
    %v211 = vmin.f32 %v193, 0.0
    %v212 = vmul.f32 %v204, 1.442695
    %v213 = vpow.pop %v212
    %v214 = vmul.f32 %v205, 1.442695
    %v215 = vpow.pop %v214
    %v216 = vmul.f32 %v206, 1.442695
    %v217 = vpow.pop %v216
    %v218 = vmul.f32 %v207, 1.442695
    %v219 = vpow.pop %v218
    %v220 = vmul.f32 %v208, 1.442695
    %v221 = vpow.pop %v220
    %v222 = vmul.f32 %v209, 1.442695
    %v223 = vpow.pop %v222
    %v224 = vmul.f32 %v210, 1.442695
    %v225 = vpow.pop %v224
    %v226 = vmul.f32 %v211, 1.442695
    %v227 = vpow.pop %v226
    %v228 = vsub.f32 %v213, 1.0
    %v229 = vsub.f32 %v215, 1.0
    %v230 = vsub.f32 %v217, 1.0
    %v231 = vsub.f32 %v219, 1.0
    %v232 = vsub.f32 %v221, 1.0
    %v233 = vsub.f32 %v223, 1.0
    %v234 = vsub.f32 %v225, 1.0
    %v235 = vsub.f32 %v227, 1.0
    %v236 = vsel %vm196, %v166, %v228
    %v237 = vsel %vm197, %v169, %v229
    %v238 = vsel %vm198, %v174, %v230
    %v239 = vsel %vm199, %v177, %v231
    %v240 = vsel %vm200, %v182, %v232
    %v241 = vsel %vm201, %v185, %v233
    %v242 = vsel %vm202, %v190, %v234
    %v243 = vsel %vm203, %v193, %v235
    %244 = vst [vmem:[#allocation2] sm:$0xff] %v236
    %245 = vst [vmem:[#allocation2 + $0x8] sm:$0xff] %v237
    %246 = vst [vmem:[#allocation2 + $0x10] sm:$0xff] %v238
    %247 = vst [vmem:[#allocation2 + $0x18] sm:$0xff] %v239
    %248 = vst [vmem:[#allocation2 + $0x20] sm:$0xff] %v240
    %249 = vst [vmem:[#allocation2 + $0x28] sm:$0xff] %v241
    %250 = vst [vmem:[#allocation2 + $0x30] sm:$0xff] %v242
    %251 = vst [vmem:[#allocation2 + $0x38] sm:$0xff] %v243
    %v252 = vld [vmem:[#allocation2] ss:$4 sm:$0xff]
    %s253 = scalar_lea.vmem [#allocation2], 32
    %v254 = vld [vmem:[%s253] ss:$4 sm:$0xff]
    %s255 = scalar_lea.vmem [#allocation2], 1
    %v256 = vld [vmem:[%s255] ss:$4 sm:$0xff]
    %s257 = scalar_lea.vmem [#allocation2], 33
    %v258 = vld [vmem:[%s257] ss:$4 sm:$0xff]
    %v259 = vadd.f32 %v252, %v256
    %v260 = vadd.f32 %v254, %v258
    %s261 = scalar_lea.vmem [#allocation2], 2
    %v262 = vld [vmem:[%s261] ss:$4 sm:$0xff]
    %s263 = scalar_lea.vmem [#allocation2], 34
    %v264 = vld [vmem:[%s263] ss:$4 sm:$0xff]
    %v265 = vadd.f32 %v259, %v262
    %v266 = vadd.f32 %v260, %v264
    %s267 = scalar_lea.vmem [#allocation2], 3
    %v268 = vld [vmem:[%s267] ss:$4 sm:$0xff]
    %s269 = scalar_lea.vmem [#allocation2], 35
    %v270 = vld [vmem:[%s269] ss:$4 sm:$0xff]
    %v271 = vadd.f32 %v265, %v268
    %v272 = vadd.f32 %v266, %v270
    %v273 = vmul.f32 %v271, 0.25
    %v274 = vmul.f32 %v272, 0.25
    %v275 = vlaneseq
    %v276 = vshrl.u32 %v275, 7
    %v277 = vadd.s32 %v276, 8
    %vm278 = vcmp.lt.s32.totalorder %v276, 0
    %v279 = vsub.s32 0, %v276
    %v280 = vsel %vm278, %v279, %v276
    %v281 = vshrl.u32 %v280, 3
    %v282 = vand.u32 %v280, 7
    %v283 = vsub.s32 0, %v282
    %v284 = vsel %vm278, %v283, %v282
    %vm285 = vcmp.lt.s32.totalorder %v277, 0
    %v286 = vsub.s32 0, %v277
    %v287 = vsel %vm285, %v286, %v277
    %v288 = vshrl.u32 %v287, 3
    %v289 = vand.u32 %v287, 7
    %v290 = vsub.s32 0, %v289
    %v291 = vsel %vm285, %v290, %v289
    %vm292 = vcmp.ne.s32.totalorder %v284, 0
    %vm293 = vcmp.ne.s32.totalorder %v291, 0
    %vm294 = vcmp.lt.s32.totalorder %v284, 0
    %vm295 = vcmp.lt.s32.totalorder %v291, 0
    %vm296 = vmand %vm294, %vm292
    %vm297 = vmand %vm295, %vm293
    %v298 = vadd.s32 %v284, 8
    %v299 = vadd.s32 %v291, 8
    %v300 = vsel %vm296, %v298, %v284
    %v301 = vsel %vm297, %v299, %v291
    %v302 = vrot.slane %v273, 1
    %v303 = vrot.slane %v274, 1
    %vm304 = vcmp.lt.s32.totalorder %v276, 7
    %v305 = vsel %vm304, %v302, %v303
    %v306 = vsel %vm304, %v303, %v302
    %vm307 = vcmp.ge.s32.totalorder %v300, 4294967295
    %vm308 = vcmp.ge.s32.totalorder %v301, 4294967295
    %vm309 = vcmp.lt.s32.totalorder %v300, 7
    %vm310 = vcmp.lt.s32.totalorder %v301, 7
    %vm311 = vmand %vm307, %vm309
    %vm312 = vmand %vm308, %vm310
    %v313 = vsel %vm311, 1, 0
    %v314 = vsel %vm312, 1, 0
    %vm315 = vcmp.eq.s32.totalorder %v313, 1
    %vm316 = vcmp.eq.s32.totalorder %v314, 1
    %v317 = vsel %vm315, %v305, 0.0
    %v318 = vsel %vm316, %v306, 0.0
    %v319 = vpack.c.bf16 %v274, %v273
    %v320 = vpack.c.bf16 %v318, %v317
    %v321 = vld [vmem:[%s3] sm:$0xf]
    %v322 = vld [vmem:[%s3 + $0x4] sm:$0xf]
    %v323 = vld [vmem:[%s3 + $0x8] sm:$0xf]
    %v324 = vld [vmem:[%s3 + $0xc] sm:$0xf]
    %v325 = vld [vmem:[%s3 + $0x10] sm:$0xf]
    %v326 = vld [vmem:[%s3 + $0x14] sm:$0xf]
    %v327 = vld [vmem:[%s3 + $0x18] sm:$0xf]
    %v328 = vld [vmem:[%s3 + $0x1c] sm:$0xf]
    %v329 = vld [vmem:[%s3 + $0x20] sm:$0xf]
    %v330 = vld [vmem:[%s3 + $0x24] sm:$0xf]
    %v331 = vld [vmem:[%s3 + $0x28] sm:$0xf]
    %v332 = vld [vmem:[%s3 + $0x2c] sm:$0xf]
    %v333 = vld [vmem:[%s3 + $0x30] sm:$0xf]
    %v334 = vld [vmem:[%s3 + $0x34] sm:$0xf]
    %v335 = vld [vmem:[%s3 + $0x38] sm:$0xf]
    %v336 = vld [vmem:[%s3 + $0x3c] sm:$0xf]
    %v337 = vld [vmem:[%s3 + $0x40] sm:$0xf]
    %v338 = vld [vmem:[%s3 + $0x44] sm:$0xf]
    %v339 = vld [vmem:[%s3 + $0x48] sm:$0xf]
    %v340 = vld [vmem:[%s3 + $0x4c] sm:$0xf]
    %v341 = vld [vmem:[%s3 + $0x50] sm:$0xf]
    %v342 = vld [vmem:[%s3 + $0x54] sm:$0xf]
    %v343 = vld [vmem:[%s3 + $0x58] sm:$0xf]
    %v344 = vld [vmem:[%s3 + $0x5c] sm:$0xf]
    %v345 = vld [vmem:[%s3 + $0x60] sm:$0xf]
    %v346 = vld [vmem:[%s3 + $0x64] sm:$0xf]
    %v347 = vld [vmem:[%s3 + $0x68] sm:$0xf]
    %v348 = vld [vmem:[%s3 + $0x6c] sm:$0xf]
    %v349 = vld [vmem:[%s3 + $0x70] sm:$0xf]
    %v350 = vld [vmem:[%s3 + $0x74] sm:$0xf]
    %v351 = vld [vmem:[%s3 + $0x78] sm:$0xf]
    %v352 = vld [vmem:[%s3 + $0x7c] sm:$0xf]
    %v353 = vld [vmem:[%s4] sm:$0x1]
    %v355 = vlaneseq
    %v356 = vshrl.u32 %v355, 7
    %v357 = vsub.s32 0, %v356
    %v358 = vrot.slane %v353, %v357
    %v392 = vunpack.c.l.b16 %v321
    %v393 = vunpack.c.l.b16 %v322
    %v394 = vunpack.c.l.b16 %v323
    %v395 = vunpack.c.l.b16 %v324
    %v396 = vunpack.c.l.b16 %v325
    %v397 = vunpack.c.l.b16 %v326
    %v398 = vunpack.c.l.b16 %v327
    %v399 = vunpack.c.l.b16 %v328
    %v400 = vunpack.c.l.b16 %v329
    %v401 = vunpack.c.l.b16 %v330
    %v402 = vunpack.c.l.b16 %v331
    %v403 = vunpack.c.l.b16 %v332
    %v404 = vunpack.c.l.b16 %v333
    %v405 = vunpack.c.l.b16 %v334
    %v406 = vunpack.c.l.b16 %v335
    %v407 = vunpack.c.l.b16 %v336
    %v408 = vunpack.c.l.b16 %v337
    %v409 = vunpack.c.l.b16 %v338
    %v410 = vunpack.c.l.b16 %v339
    %v411 = vunpack.c.l.b16 %v340
    %v412 = vunpack.c.l.b16 %v341
    %v413 = vunpack.c.l.b16 %v342
    %v414 = vunpack.c.l.b16 %v343
    %v415 = vunpack.c.l.b16 %v344
    %v416 = vunpack.c.l.b16 %v345
    %v417 = vunpack.c.l.b16 %v346
    %v418 = vunpack.c.l.b16 %v347
    %v419 = vunpack.c.l.b16 %v348
    %v420 = vunpack.c.l.b16 %v349
    %v421 = vunpack.c.l.b16 %v350
    %v422 = vunpack.c.l.b16 %v351
    %v423 = vunpack.c.l.b16 %v352
    %v424 = vpack.c.b16 %v393, %v392
    %v425 = vpack.c.b16 %v395, %v394
    %v426 = vpack.c.b16 %v397, %v396
    %v427 = vpack.c.b16 %v399, %v398
    %v428 = vpack.c.b16 %v401, %v400
    %v429 = vpack.c.b16 %v403, %v402
    %v430 = vpack.c.b16 %v405, %v404
    %v431 = vpack.c.b16 %v407, %v406
    %v432 = vpack.c.b16 %v409, %v408
    %v433 = vpack.c.b16 %v411, %v410
    %v434 = vpack.c.b16 %v413, %v412
    %v435 = vpack.c.b16 %v415, %v414
    %v436 = vpack.c.b16 %v417, %v416
    %v437 = vpack.c.b16 %v419, %v418
    %v438 = vpack.c.b16 %v421, %v420
    %v439 = vpack.c.b16 %v423, %v422
    %456 = vmatprep.subr.bf16.mxu0 0
    %457 = vmatpush1.bf16.msra.mxu0 %v424
    %458 = vmatprep.subr.bf16.mxu0 0
    %459 = vmatpush1.bf16.msra.mxu0 %v425
    %460 = vmatprep.subr.bf16.mxu0 0
    %461 = vmatpush1.bf16.msra.mxu0 %v426
    %462 = vmatprep.subr.bf16.mxu0 0
    %463 = vmatpush1.bf16.msra.mxu0 %v427
    %464 = vmatprep.subr.bf16.mxu0 0
    %465 = vmatpush1.bf16.msra.mxu0 %v428
    %466 = vmatprep.subr.bf16.mxu0 0
    %467 = vmatpush1.bf16.msra.mxu0 %v429
    %468 = vmatprep.subr.bf16.mxu0 0
    %469 = vmatpush1.bf16.msra.mxu0 %v430
    %470 = vmatprep.subr.bf16.mxu0 0
    %471 = vmatpush1.bf16.msra.mxu0 %v431
    %472 = vmatprep.subr.bf16.mxu0 0
    %473 = vmatpush1.bf16.msra.mxu0 %v432
    %474 = vmatprep.subr.bf16.mxu0 0
    %475 = vmatpush1.bf16.msra.mxu0 %v433
    %476 = vmatprep.subr.bf16.mxu0 0
    %477 = vmatpush1.bf16.msra.mxu0 %v434
    %478 = vmatprep.subr.bf16.mxu0 0
    %479 = vmatpush1.bf16.msra.mxu0 %v435
    %480 = vmatprep.subr.bf16.mxu0 0
    %481 = vmatpush1.bf16.msra.mxu0 %v436
    %482 = vmatprep.subr.bf16.mxu0 0
    %483 = vmatpush1.bf16.msra.mxu0 %v437
    %484 = vmatprep.subr.bf16.mxu0 0
    %485 = vmatpush1.bf16.msra.mxu0 %v438
    %486 = vmatprep.subr.bf16.mxu0 0
    %487 = vmatpush1.bf16.msra.mxu0 %v439
    %488 = vmatprep.mubr.bf16.mxu0 %v320
    %489 = vmatmul.mubr.bf16.gmra.mrb[0].mxu0 %v319
    %v490 = vpop.f32.mrb[0].mxu0
    %v491 = vadd.f32 %v358, %v490
    %v492 = vpop.f32.mrb[0].mxu0
    %v493 = vpop.f32.mrb[0].mxu0
    %v494 = vadd.f32 %v358, %v493
    %v495 = vpop.f32.mrb[0].mxu0
    %496 = vdwg.mxu0
    %vm497 = vcmp.gt.f32.partialorder %v491, 0.0
    %vm498 = vcmp.gt.f32.partialorder %v494, 0.0
    %v499 = vmin.f32 %v491, 0.0
    %v500 = vmin.f32 %v494, 0.0
    %v501 = vmul.f32 %v499, 1.442695
    %v502 = vpow.pop %v501
    %v503 = vmul.f32 %v500, 1.442695
    %v504 = vpow.pop %v503
    %v505 = vsub.f32 %v502, 1.0
    %v506 = vsub.f32 %v504, 1.0
    %v507 = vsel %vm497, %v491, %v505
    %v508 = vsel %vm498, %v494, %v506
    %509 = vst [vmem:[#allocation3] sm:$0xff] %v507
    %510 = vst [vmem:[#allocation3 + $0x8] sm:$0xff] %v508
    %v511 = vld [vmem:[#allocation3] ss:$8 sm:$0x3]
    %s512 = scalar_lea.vmem [#allocation3], 1
    %v513 = vld [vmem:[%s512] ss:$8 sm:$0x3]
    %v514 = vadd.f32 %v511, %v513
    %s515 = scalar_lea.vmem [#allocation3], 2
    %v516 = vld [vmem:[%s515] ss:$8 sm:$0x3]
    %v517 = vadd.f32 %v514, %v516
    %s518 = scalar_lea.vmem [#allocation3], 3
    %v519 = vld [vmem:[%s518] ss:$8 sm:$0x3]
    %v520 = vadd.f32 %v517, %v519
    %s521 = scalar_lea.vmem [#allocation3], 4
    %v522 = vld [vmem:[%s521] ss:$8 sm:$0x3]
    %v523 = vadd.f32 %v520, %v522
    %s524 = scalar_lea.vmem [#allocation3], 5
    %v525 = vld [vmem:[%s524] ss:$8 sm:$0x3]
    %v526 = vadd.f32 %v523, %v525
    %s527 = scalar_lea.vmem [#allocation3], 6
    %v528 = vld [vmem:[%s527] ss:$8 sm:$0x3]
    %v529 = vadd.f32 %v526, %v528
    %s530 = scalar_lea.vmem [#allocation3], 7
    %v531 = vld [vmem:[%s530] ss:$8 sm:$0x3]
    %v532 = vadd.f32 %v529, %v531
    %v533 = vmul.f32 %v532, 0.125
    %v534 = vpack.c.bf16 %v533, %v533
    %v535 = vld [vmem:[%s5] sm:$0xf]
    %v536 = vld [vmem:[%s5 + $0x4] sm:$0xf]
    %v537 = vld [vmem:[%s5 + $0x8] sm:$0xf]
    %v538 = vld [vmem:[%s5 + $0xc] sm:$0xf]
    %v539 = vld [vmem:[%s5 + $0x10] sm:$0xf]
    %v540 = vld [vmem:[%s5 + $0x14] sm:$0xf]
    %v541 = vld [vmem:[%s5 + $0x18] sm:$0xf]
    %v542 = vld [vmem:[%s5 + $0x1c] sm:$0xf]
    %v543 = vld [vmem:[%s5 + $0x20] sm:$0xf]
    %v544 = vld [vmem:[%s5 + $0x24] sm:$0xf]
    %v545 = vld [vmem:[%s5 + $0x28] sm:$0xf]
    %v546 = vld [vmem:[%s5 + $0x2c] sm:$0xf]
    %v547 = vld [vmem:[%s5 + $0x30] sm:$0xf]
    %v548 = vld [vmem:[%s5 + $0x34] sm:$0xf]
    %v549 = vld [vmem:[%s5 + $0x38] sm:$0xf]
    %v550 = vld [vmem:[%s5 + $0x3c] sm:$0xf]
    %v551 = vld [vmem:[%s6] sm:$0x1]
    %v553 = vlaneseq
    %v554 = vshrl.u32 %v553, 7
    %v555 = vsub.s32 0, %v554
    %v556 = vrot.slane %v551, %v555
    %v574 = vunpack.c.l.b16 %v535
    %v575 = vunpack.c.l.b16 %v536
    %v576 = vunpack.c.l.b16 %v537
    %v577 = vunpack.c.l.b16 %v538
    %v578 = vunpack.c.l.b16 %v539
    %v579 = vunpack.c.l.b16 %v540
    %v580 = vunpack.c.l.b16 %v541
    %v581 = vunpack.c.l.b16 %v542
    %v582 = vunpack.c.l.b16 %v543
    %v583 = vunpack.c.l.b16 %v544
    %v584 = vunpack.c.l.b16 %v545
    %v585 = vunpack.c.l.b16 %v546
    %v586 = vunpack.c.l.b16 %v547
    %v587 = vunpack.c.l.b16 %v548
    %v588 = vunpack.c.l.b16 %v549
    %v589 = vunpack.c.l.b16 %v550
    %v590 = vpack.c.b16 %v575, %v574
    %v591 = vpack.c.b16 %v577, %v576
    %v592 = vpack.c.b16 %v579, %v578
    %v593 = vpack.c.b16 %v581, %v580
    %v594 = vpack.c.b16 %v583, %v582
    %v595 = vpack.c.b16 %v585, %v584
    %v596 = vpack.c.b16 %v587, %v586
    %v597 = vpack.c.b16 %v589, %v588
    %606 = vmatprep.subr.bf16.mxu0 0
    %607 = vmatpush1.bf16.msra.mxu0 %v590
    %608 = vmatprep.subr.bf16.mxu0 0
    %609 = vmatpush1.bf16.msra.mxu0 %v591
    %610 = vmatprep.subr.bf16.mxu0 0
    %611 = vmatpush1.bf16.msra.mxu0 %v592
    %612 = vmatprep.subr.bf16.mxu0 0
    %613 = vmatpush1.bf16.msra.mxu0 %v593
    %614 = vmatprep.subr.bf16.mxu0 0
    %615 = vmatpush1.bf16.msra.mxu0 %v594
    %616 = vmatprep.subr.bf16.mxu0 0
    %617 = vmatpush1.bf16.msra.mxu0 %v595
    %618 = vmatprep.subr.bf16.mxu0 0
    %619 = vmatpush1.bf16.msra.mxu0 %v596
    %620 = vmatprep.subr.bf16.mxu0 0
    %621 = vmatpush1.bf16.msra.mxu0 %v597
    %622 = vmatprep.subr.bf16.mxu0 0
    %623 = vmatpush1.bf16.msra.mxu0 0
    %624 = vmatprep.subr.bf16.mxu0 0
    %625 = vmatpush1.bf16.msra.mxu0 0
    %626 = vmatprep.subr.bf16.mxu0 0
    %627 = vmatpush1.bf16.msra.mxu0 0
    %628 = vmatprep.subr.bf16.mxu0 0
    %629 = vmatpush1.bf16.msra.mxu0 0
    %630 = vmatprep.subr.bf16.mxu0 0
    %631 = vmatpush1.bf16.msra.mxu0 0
    %632 = vmatprep.subr.bf16.mxu0 0
    %633 = vmatpush1.bf16.msra.mxu0 0
    %634 = vmatprep.subr.bf16.mxu0 0
    %635 = vmatpush1.bf16.msra.mxu0 0
    %636 = vmatprep.subr.bf16.mxu0 0
    %637 = vmatpush1.bf16.msra.mxu0 0
    %638 = vmatprep.mubr.bf16.mxu0 0
    %639 = vmatmul.mubr.bf16.gmra.mrb[0].mxu0 %v534
    %v640 = vpop.f32.mrb[0].mxu0
    %v641 = vadd.f32 %v556, %v640
    %v642 = vpop.f32.mrb[0].mxu0
    %v643 = vpop.f32.mrb[0].mxu0
    %v644 = vpop.f32.mrb[0].mxu0
    %645 = vdwg.mxu0
    %646 = vst [vmem:[#allocation4] sm:$0x3] %v641
    // Predicated region
    $region30: #{eegnet_forward_pallas.1} parent=1 // pred_check
      _
    $region31: #{eegnet_forward_pallas.1} parent=1 // pred_check_branch
      %648 = sbr.rel (0) target = $region33
    $region32: #{eegnet_forward_pallas.1} parent=1 // pred_region
      %s650 = ssub.s32 32, 32
      %651 = vsyncadd [#allocation5], %s650
      %s653 = sshll.u32 [#allocation4], 4
      %s654 = int_to_ptr.vmem [resolvable:$true] %s653
      %656 = dma.vmem_to_hbm [thread:$0]  %s654, 32, %s7, [#allocation5]
    $region33: #{eegnet_forward_pallas.1} parent=1 // pred_fallthru
      _
    // Predicated region
    $region34: #{eegnet_forward_pallas.1} parent=1 // pred_check
      _
    $region35: #{eegnet_forward_pallas.1} parent=1 // pred_check_branch
      %658 = sbr.rel (0) target = $region37
    $region36: #{eegnet_forward_pallas.1} parent=1 // pred_region
      %659 = dma.done [#allocation5], 32
    $region37: #{eegnet_forward_pallas.1} parent=1 // pred_fallthru
      _
    %660 = vsyncpa [#allocation5], 1

</llo_original>
